<compile_context>
chip_gen: v6e
topology: v6e:2x2x1
jax: 0.10.0
libtpu: 0.0.40
codegen_flags: <defaults>
</compile_context>

<pallas_src>
import functools
import math

import jax
import jax.numpy as jnp
from jax.experimental import pallas as pl
from jax.experimental.pallas import tpu as pltpu


F_PAD_UNIT = 128          # lane width
TILE_ND = 32              # dst-node tile (multiple of 32 keeps int8 adj tiles native)
TILE_NS = 128             # src-node tile (multiple of 128)
DC = 8                    # dst sub-chunk inside a tile (bounds pooling working set)
VMEM_LIMIT = 64 * 1024 * 1024


def _ceil_to(x, m):
    return (x + m - 1) // m * m


def _pad2d(x, rows, cols):
    r, c = x.shape
    return jnp.pad(x, ((0, rows - r), (0, cols - c)))


# ----------------------------------------------------------------------------
# Kernel 1: fc_pool    p = relu(h_src @ W_pool^T + b_pool)
# ----------------------------------------------------------------------------
def _fc_pool_kernel(h_ref, w_ref, b_ref, p_ref):
    p_ref[...] = jnp.maximum(
        jnp.dot(h_ref[...], w_ref[...], preferred_element_type=jnp.float32)
        + b_ref[...],
        0.0,
    )


def fc_pool(h_src, wp_t, bp, *, tile_m):
    ns_pad, fs_pad = h_src.shape
    return pl.pallas_call(
        _fc_pool_kernel,
        out_shape=jax.ShapeDtypeStruct((ns_pad, fs_pad), jnp.float32),
        grid=(ns_pad // tile_m,),
        in_specs=[
            pl.BlockSpec((tile_m, fs_pad), lambda i: (i, 0)),
            pl.BlockSpec((fs_pad, fs_pad), lambda i: (0, 0)),
            pl.BlockSpec((1, fs_pad), lambda i: (0, 0)),
        ],
        out_specs=pl.BlockSpec((tile_m, fs_pad), lambda i: (i, 0)),
        compiler_params=pltpu.CompilerParams(
            dimension_semantics=("parallel",),
            vmem_limit_bytes=VMEM_LIMIT,
        ),
    )(h_src, wp_t, bp)


# ----------------------------------------------------------------------------
# Kernel 2: running max-pool over in-neighbours + fused output matmul
#           + fused HeteroGraphConv 'sum' accumulation
# ----------------------------------------------------------------------------
def _pool_out_kernel(adj_ref, p_ref, hdst_ref, wcat_ref, b_ref, accin_ref,
                     out_ref, xcat_ref, *, tile_nd, fd_pad, fs_pad):
    nsj = pl.program_id(1)

    @pl.when(nsj == 0)
    def _init():
        xcat_ref[...] = jnp.zeros_like(xcat_ref)

    # Running max-pool over this src tile.  p >= 0 (post-ReLU) and adj is 0/1,
    # so max_s adj[d, s] * p[s, f] equals the masked max-pool with
    # zero-in-degree destinations mapping to 0 (DGL 'pool' semantics).
    adjf = adj_ref[...].astype(jnp.float32)                 # [tile_nd, tile_ns]
    p = p_ref[...]                                          # [tile_ns, fs_pad]
    for c in range(tile_nd // DC):                          # static; bounded working set
        rows = slice(c * DC, (c + 1) * DC)
        a = adjf[rows, :]                                   # [DC, tile_ns]
        cand = jnp.max(a[:, :, None] * p[None, :, :], axis=1)   # [DC, fs_pad]
        acc = xcat_ref[rows, fd_pad:fd_pad + fs_pad]
        xcat_ref[rows, fd_pad:fd_pad + fs_pad] = jnp.maximum(acc, cand)

    @pl.when(nsj == pl.num_programs(1) - 1)
    def _finish():
        # Fused output matmul: [h_dst | neigh] @ [W_self^T ; W_neigh^T] + bias,
        # plus the running relation-sum accumulator (aliased to the output).
        xcat_ref[:, 0:fd_pad] = hdst_ref[...]
        out = jnp.dot(xcat_ref[...], wcat_ref[...],
                      preferred_element_type=jnp.float32)
        out_ref[...] = (out + b_ref[...] + accin_ref[...]).astype(out_ref.dtype)


def sage_pool_conv(h_src, h_dst, adj_i8, prep, acc_prev, *,
                   tile_nd=TILE_ND, tile_ns=TILE_NS):
    """One relation of HeteroGraphConv: SAGEConv(aggregator_type='pool').

    Operands are pre-padded:
      h_src [ns_pad, fs_pad] f32,  h_dst [nd_pad, fd_pad] f32,
      adj_i8 [nd_pad, ns_pad] int8 (adj[d, s] = 1 iff edge s -> d),
      acc_prev [nd_pad, fout_pad] f32 running 'sum' accumulator (aliased to out).
    """
    nd_pad, ns_pad = adj_i8.shape
    fs_pad = h_src.shape[1]
    fd_pad = h_dst.shape[1]
    fout_pad = prep["w_cat"].shape[1]
    assert nd_pad % tile_nd == 0 and ns_pad % tile_ns == 0 and tile_nd % DC == 0

    # Hoisted fc_pool pass (not recomputed per dst tile).
    p = fc_pool(h_src, prep["wp_t"], prep["bp"], tile_m=tile_ns)

    kernel = functools.partial(_pool_out_kernel, tile_nd=tile_nd,
                               fd_pad=fd_pad, fs_pad=fs_pad)
    grid = (nd_pad // tile_nd, ns_pad // tile_ns)
    return pl.pallas_call(
        kernel,
        out_shape=jax.ShapeDtypeStruct((nd_pad, fout_pad), jnp.float32),
        grid=grid,
        in_specs=[
            pl.BlockSpec((tile_nd, tile_ns), lambda i, j: (i, j)),           # adj
            pl.BlockSpec((tile_ns, fs_pad), lambda i, j: (j, 0)),            # p
            pl.BlockSpec((tile_nd, fd_pad), lambda i, j: (i, 0)),            # h_dst
            pl.BlockSpec((fd_pad + fs_pad, fout_pad), lambda i, j: (0, 0)),  # w_cat
            pl.BlockSpec((1, fout_pad), lambda i, j: (0, 0)),                # bias
            pl.BlockSpec((tile_nd, fout_pad), lambda i, j: (i, 0)),          # acc_prev
        ],
        out_specs=pl.BlockSpec((tile_nd, fout_pad), lambda i, j: (i, 0)),
        scratch_shapes=[pltpu.VMEM((tile_nd, fd_pad + fs_pad), jnp.float32)],
        input_output_aliases={5: 0},
        compiler_params=pltpu.CompilerParams(
            dimension_semantics=("parallel", "arbitrary"),
            vmem_limit_bytes=VMEM_LIMIT,
        ),
    )(adj_i8, p, h_dst, prep["w_cat"], prep["bias"], acc_prev)


# ----------------------------------------------------------------------------
# HeteroGraphConv(aggregate='sum') and RGCN forward (padded domain)
# ----------------------------------------------------------------------------
def hetero_conv(graph, feats, layer_prep, n_pad, fout_pad):
    """graph: {rel: (src_type, dst_type, adj_i8[nd_pad, ns_pad])}."""
    out = {}
    for rel, (st, dt, adj_i8) in graph.items():
        acc = out.get(dt)
        if acc is None:
            acc = jnp.zeros((n_pad[dt], fout_pad), jnp.float32)
        out[dt] = sage_pool_conv(feats[st], feats[dt], adj_i8,
                                 layer_prep[rel], acc)
    return out


def rgcn_forward(graph, inputs, prep, n_pad, fout_pad):
    h = hetero_conv(graph, inputs, prep["conv1"], n_pad, fout_pad)
    h = {k: jnp.maximum(v, 0.0) for k, v in h.items()}        # F.relu
    h = hetero_conv(graph, h, prep["conv2"], n_pad, fout_pad)
    return h


# ----------------------------------------------------------------------------
# Parameters: init + one-time prep (pre-transpose / pre-concat / pre-pad)
# ----------------------------------------------------------------------------
def init_sage_params(key, in_src, in_dst, out_feats):
    k1, k2, k3, k4 = jax.random.split(key, 4)
    s = 0.1
    return dict(
        w_pool=s * jax.random.normal(k1, (in_src, in_src), jnp.float32),
        b_pool=s * jax.random.normal(k2, (in_src,), jnp.float32),
        w_self=s * jax.random.normal(k3, (out_feats, in_dst), jnp.float32),
        w_neigh=s * jax.random.normal(k4, (out_feats, in_src), jnp.float32),
        bias=jnp.zeros((out_feats,), jnp.float32),
    )


def prepare_sage_params(p, fs_pad, fd_pad, fout_pad):
    """Done once at setup time, not per forward call."""
    wp_t = _pad2d(p["w_pool"].T, fs_pad, fs_pad)
    bp = _pad2d(p["b_pool"][None, :], 1, fs_pad)
    ws_t = _pad2d(p["w_self"].T, fd_pad, fout_pad)
    wn_t = _pad2d(p["w_neigh"].T, fs_pad, fout_pad)
    return dict(
        wp_t=wp_t, bp=bp,
        w_cat=jnp.concatenate([ws_t, wn_t], axis=0),   # [fd_pad + fs_pad, fout_pad]
        bias=_pad2d(p["bias"][None, :], 1, fout_pad),
    )


# ----------------------------------------------------------------------------
# Pure-JAX reference (unpadded) for correctness check
# ----------------------------------------------------------------------------
def sage_pool_ref(h_src, h_dst, adj, p):
    pool = jnp.maximum(h_src @ p["w_pool"].T + p["b_pool"], 0.0)
    masked = jnp.where(adj[:, :, None] > 0.5, pool[None, :, :], -1e30)
    neigh = jnp.max(masked, axis=1)
    deg = adj.sum(axis=1, keepdims=True)
    neigh = jnp.where(deg > 0.5, neigh, 0.0)
    return h_dst @ p["w_self"].T + neigh @ p["w_neigh"].T + p["bias"]


def rgcn_forward_ref(graph, inputs, params):
    def conv(feats, rel_params):
        out = {}
        for rel, (st, dt, adj) in graph.items():
            y = sage_pool_ref(feats[st], feats[dt], adj, rel_params[rel])
            out[dt] = y if dt not in out else out[dt] + y
        return out
    h = conv(inputs, params["conv1"])
    h = {k: jnp.maximum(v, 0.0) for k, v in h.items()}
    return conv(h, params["conv2"])


if __name__ == "__main__":
    key = jax.random.PRNGKey(0)

    # Small hetero graph: 2 node types, 3 relations.
    NU, NI = 8, 8          # num user / item nodes
    IN_FEATS = 16          # in_feats_list = [16, 16, 16]
    HID = 32               # hid_feats  (module's forward emits hid_feats)
    rel_defs = {           # rel -> (src_type, dst_type)
        "follows": ("user", "user"),
        "buys": ("user", "item"),
        "liked_by": ("item", "user"),
    }
    n_nodes = {"user": NU, "item": NI}

    k_feat_u, k_feat_i, k_adj, k_p1, k_p2 = jax.random.split(key, 5)

    inputs = {
        "user": jax.random.normal(k_feat_u, (NU, IN_FEATS), jnp.float32),
        "item": jax.random.normal(k_feat_i, (NI, IN_FEATS), jnp.float32),
    }

    graph = {}
    adj_keys = jax.random.split(k_adj, len(rel_defs))
    for (rel, (st, dt)), ka in zip(rel_defs.items(), adj_keys):
        adj = jax.random.bernoulli(ka, 0.35, (n_nodes[dt], n_nodes[st]))
        graph[rel] = (st, dt, adj.astype(jnp.float32))

    p1_keys = jax.random.split(k_p1, len(rel_defs))
    p2_keys = jax.random.split(k_p2, len(rel_defs))
    params = {
        "conv1": {rel: init_sage_params(k, IN_FEATS, IN_FEATS, HID)
                  for rel, k in zip(rel_defs, p1_keys)},
        "conv2": {rel: init_sage_params(k, HID, HID, HID)
                  for rel, k in zip(rel_defs, p2_keys)},
    }

    # ---- padded / prepared operands for the Pallas kernels ------------------
    F_PAD = _ceil_to(max(IN_FEATS, HID), F_PAD_UNIT)       # lane-dense feature width
    N_UNIT = math.lcm(TILE_ND, TILE_NS)                    # node-count pad unit
    n_pad = {t: _ceil_to(n, N_UNIT) for t, n in n_nodes.items()}

    inputs_pad = {t: _pad2d(inputs[t], n_pad[t], F_PAD) for t in inputs}
    graph_pad = {
        rel: (st, dt, _pad2d(adj, n_pad[dt], n_pad[st]).astype(jnp.int8))
        for rel, (st, dt, adj) in graph.items()
    }
    prep = {
        layer: {rel: prepare_sage_params(p, F_PAD, F_PAD, F_PAD)
                for rel, p in layer_params.items()}
        for layer, layer_params in params.items()
    }

    out_pad = rgcn_forward(graph_pad, inputs_pad, prep, n_pad, F_PAD)
    out_pad = jax.tree_util.tree_map(jax.block_until_ready, out_pad)
    out = {t: out_pad[t][:n_nodes[t], :HID] for t in out_pad}

    ref = rgcn_forward_ref(graph, inputs, params)
    for nt in out:
        assert out[nt].shape == (n_nodes[nt], HID)
        assert jnp.allclose(out[nt], ref[nt], atol=1e-4, rtol=1e-4), nt

    print("KERNEL_OK")
</pallas_src>

<mosaic_0001>
module attributes {stable_mosaic.version = 11 : i64} {
  func.func @_fc_pool_kernel(%arg0: i32, %arg1: memref<128x128xf32, #tpu.memory_space<vmem>>, %arg2: memref<128x128xf32, #tpu.memory_space<vmem>>, %arg3: memref<1x128xf32, #tpu.memory_space<vmem>>, %arg4: memref<128x128xf32, #tpu.memory_space<vmem>>) attributes {dimension_semantics = [#tpu.dimension_semantics<parallel>], iteration_bounds = array<i64: 1>, scalar_prefetch = 0 : i64, scratch_operands = 0 : i64, tpu.core_type = #tpu.core_type<tc>, window_params = [{transform_indices = @transform_0, window_bounds = array<i64: 128, 128>}, {pipeline_mode = #tpu.pipeline_mode<synchronous>, transform_indices = @transform_1, window_bounds = array<i64: 128, 128>}, {pipeline_mode = #tpu.pipeline_mode<synchronous>, transform_indices = @transform_2, window_bounds = array<i64: 1, 128>}, {transform_indices = @transform_3, window_bounds = array<i64: 128, 128>}]} {
    %c0 = arith.constant 0 : index
    %c0_0 = arith.constant 0 : index
    %0 = vector.load %arg1[%c0, %c0_0] : memref<128x128xf32, #tpu.memory_space<vmem>>, vector<128x128xf32>
    %c0_1 = arith.constant 0 : index
    %c0_2 = arith.constant 0 : index
    %1 = vector.load %arg2[%c0_1, %c0_2] : memref<128x128xf32, #tpu.memory_space<vmem>>, vector<128x128xf32>
    %cst = arith.constant dense<0.000000e+00> : vector<128x128xf32>
    %2 = tpu.matmul %0, %1, %cst {dimension_numbers = #tpu.dot_dimension_numbers<[1], [0], [0], [1], [0, 0, 1, 1], [], []>} : vector<128x128xf32>, vector<128x128xf32>, vector<128x128xf32> -> vector<128x128xf32>
    %c0_3 = arith.constant 0 : index
    %c0_4 = arith.constant 0 : index
    %3 = vector.load %arg3[%c0_3, %c0_4] : memref<1x128xf32, #tpu.memory_space<vmem>>, vector<1x128xf32>
    %4 = vector.broadcast %3 : vector<1x128xf32> to vector<128x128xf32>
    %5 = arith.addf %2, %4 : vector<128x128xf32>
    %cst_5 = arith.constant 0.000000e+00 : f32
    %6 = vector.broadcast %cst_5 : f32 to vector<128x128xf32>
    %7 = arith.maximumf %5, %6 : vector<128x128xf32>
    %c0_6 = arith.constant 0 : index
    %c0_7 = arith.constant 0 : index
    %8 = vector.load %arg4[%c0_6, %c0_7] : memref<128x128xf32, #tpu.memory_space<vmem>>, vector<128x128xf32>
    tpu.vector_store %arg4[%c0_6, %c0_7], %7 {strides = array<i32>} : memref<128x128xf32, #tpu.memory_space<vmem>>, vector<128x128xf32>,
    return
  }
  func.func @transform_0(%arg0: i32) -> (i32, i32) {
    %c0_i32 = arith.constant 0 : i32
    %c0_i32_0 = arith.constant 0 : i32
    return %arg0, %c0_i32 : i32, i32
  }
  func.func @transform_1(%arg0: i32) -> (i32, i32) {
    %c0_i32 = arith.constant 0 : i32
    %c0_i32_0 = arith.constant 0 : i32
    %c0_i32_1 = arith.constant 0 : i32
    return %c0_i32, %c0_i32_0 : i32, i32
  }
  func.func @transform_2(%arg0: i32) -> (i32, i32) {
    %c0_i32 = arith.constant 0 : i32
    %c0_i32_0 = arith.constant 0 : i32
    %c0_i32_1 = arith.constant 0 : i32
    return %c0_i32, %c0_i32_0 : i32, i32
  }
  func.func @transform_3(%arg0: i32) -> (i32, i32) {
    %c0_i32 = arith.constant 0 : i32
    %c0_i32_0 = arith.constant 0 : i32
    return %arg0, %c0_i32 : i32, i32
  }
}

</mosaic_0001>

<llo_original>
// kernel: tpu_custom_call.1
$region0: #{tpu_custom_call.1}
  #allocation0 [shape = 'u32[]', space=smem, size = 0x4, offset = 0x4, fixed_abs, tag = 'smem constant byte address 0x4 - core index']
  #allocation1 [shape = 'u32[144,128]{1,0:T(1,128)}', space=vmem, size = 0x12000, scoped, tag = 'internal scratch']
  %s0 = inlined_call_operand.hbm [shape: f32[128,128], index: 0, kind: input, shape index: {}]
  %s1 = inlined_call_operand.hbm [shape: f32[128,128], index: 1, kind: input, shape index: {}]
  %s2 = inlined_call_operand.vmem [shape: f32[1,128], index: 2, kind: input, shape index: {}]
  %s3 = inlined_call_operand.hbm [shape: f32[128,128], index: 3, kind: output, shape index: {}]
  %s4 = sld [smem:[#allocation0]]
  $region30: #{tpu_custom_call.1} parent=0
    _
  %s6 = ssub.s32 1, %s4
  %s7 = scalar_select 0, %s6, %s4
  $region1: #{tpu_custom_call.1} parent=0
    #allocation2 [shape = 'u8[65536]{0}', space=vmem, size = 0x10000, scoped, tag = 'input window, operand 0, single buffered']
    #allocation3 [shape = 's32[1]{0}', space=sflag, size = 0x4, scoped, tag = 'scoped memory for tpu_custom_call.1']
    #allocation4 [shape = 's32[1]{0}', space=sflag, size = 0x4, scoped, tag = 'scoped memory for tpu_custom_call.1']
    #allocation5 [shape = 'u8[65536]{0}', space=vmem, size = 0x10000, scoped, tag = 'input window, operand 1, single buffered']
    #allocation6 [shape = 's32[1]{0}', space=sflag, size = 0x4, scoped, tag = 'scoped memory for tpu_custom_call.1']
    #allocation7 [shape = 'u8[65536]{0}', space=vmem, size = 0x10000, scoped, tag = 'output window, operand 0, single buffered']
    %8 = vsyncpa [#allocation3], 0
    %9 = vsyncpa [#allocation6], 0
    %10 = vsyncpa [#allocation4], 0
    // Predicated region
    $region2: #{tpu_custom_call.1} parent=1 // pred_check
      _
    $region3: #{tpu_custom_call.1} parent=1 // pred_check_branch
      %12 = sbr.rel (0) target = $region5
    $region4: #{tpu_custom_call.1} parent=1 // pred_region
      %s14 = ssub.s32 2048, 2048
      %15 = vsyncadd [#allocation3], %s14
      %s16 = sshll.u32 [#allocation2], 4
      %s17 = int_to_ptr.vmem [resolvable:$true] %s16
      %22 = dma.hbm_to_vmem [thread:$0]  %s0, 2048, %s17, [#allocation3], 128, 128, 8
    $region5: #{tpu_custom_call.1} parent=1 // pred_fallthru
      _
    // Predicated region
    $region6: #{tpu_custom_call.1} parent=1 // pred_check
      _
    $region7: #{tpu_custom_call.1} parent=1 // pred_check_branch
      %24 = sbr.rel (0) target = $region9
    $region8: #{tpu_custom_call.1} parent=1 // pred_region
      %s26 = ssub.s32 2048, 2048
      %27 = vsyncadd [#allocation6], %s26
      %s28 = sshll.u32 [#allocation5], 4
      %s29 = int_to_ptr.vmem [resolvable:$true] %s28
      %34 = dma.hbm_to_vmem [thread:$0]  %s1, 2048, %s29, [#allocation6], 128, 128, 8
    $region9: #{tpu_custom_call.1} parent=1 // pred_fallthru
      _
    // Predicated region
    $region10: #{tpu_custom_call.1} parent=1 // pred_check
      _
    $region11: #{tpu_custom_call.1} parent=1 // pred_check_branch
      %36 = sbr.rel (0) target = $region13
    $region12: #{tpu_custom_call.1} parent=1 // pred_region
      _
    $region13: #{tpu_custom_call.1} parent=1 // pred_fallthru
      _
    // Predicated region
    $region14: #{tpu_custom_call.1} parent=1 // pred_check
      _
    $region15: #{tpu_custom_call.1} parent=1 // pred_check_branch
      %38 = sbr.rel (0) target = $region17
    $region16: #{tpu_custom_call.1} parent=1 // pred_region
      %39 = dma.done [#allocation3], 2048
    $region17: #{tpu_custom_call.1} parent=1 // pred_fallthru
      _
    // Predicated region
    $region18: #{tpu_custom_call.1} parent=1 // pred_check
      _
    $region19: #{tpu_custom_call.1} parent=1 // pred_check_branch
      %41 = sbr.rel (0) target = $region21
    $region20: #{tpu_custom_call.1} parent=1 // pred_region
      %42 = dma.done [#allocation6], 2048
    $region21: #{tpu_custom_call.1} parent=1 // pred_fallthru
      _
    %v43 = vld [vmem:[#allocation2] sm:$0xff]
    %v44 = vld [vmem:[#allocation2 + $0x8] sm:$0xff]
    %v45 = vld [vmem:[#allocation2 + $0x10] sm:$0xff]
    %v46 = vld [vmem:[#allocation2 + $0x18] sm:$0xff]
    %v47 = vld [vmem:[#allocation2 + $0x20] sm:$0xff]
    %v48 = vld [vmem:[#allocation2 + $0x28] sm:$0xff]
    %v49 = vld [vmem:[#allocation2 + $0x30] sm:$0xff]
    %v50 = vld [vmem:[#allocation2 + $0x38] sm:$0xff]
    %v51 = vld [vmem:[#allocation2 + $0x40] sm:$0xff]
    %v52 = vld [vmem:[#allocation2 + $0x48] sm:$0xff]
    %v53 = vld [vmem:[#allocation2 + $0x50] sm:$0xff]
    %v54 = vld [vmem:[#allocation2 + $0x58] sm:$0xff]
    %v55 = vld [vmem:[#allocation2 + $0x60] sm:$0xff]
    %v56 = vld [vmem:[#allocation2 + $0x68] sm:$0xff]
    %v57 = vld [vmem:[#allocation2 + $0x70] sm:$0xff]
    %v58 = vld [vmem:[#allocation2 + $0x78] sm:$0xff]
    %v59 = vld [vmem:[#allocation5] sm:$0xff]
    %v60 = vld [vmem:[#allocation5 + $0x8] sm:$0xff]
    %v61 = vld [vmem:[#allocation5 + $0x10] sm:$0xff]
    %v62 = vld [vmem:[#allocation5 + $0x18] sm:$0xff]
    %v63 = vld [vmem:[#allocation5 + $0x20] sm:$0xff]
    %v64 = vld [vmem:[#allocation5 + $0x28] sm:$0xff]
    %v65 = vld [vmem:[#allocation5 + $0x30] sm:$0xff]
    %v66 = vld [vmem:[#allocation5 + $0x38] sm:$0xff]
    %v67 = vld [vmem:[#allocation5 + $0x40] sm:$0xff]
    %v68 = vld [vmem:[#allocation5 + $0x48] sm:$0xff]
    %v69 = vld [vmem:[#allocation5 + $0x50] sm:$0xff]
    %v70 = vld [vmem:[#allocation5 + $0x58] sm:$0xff]
    %v71 = vld [vmem:[#allocation5 + $0x60] sm:$0xff]
    %v72 = vld [vmem:[#allocation5 + $0x68] sm:$0xff]
    %v73 = vld [vmem:[#allocation5 + $0x70] sm:$0xff]
    %v74 = vld [vmem:[#allocation5 + $0x78] sm:$0xff]
    %v75 = vld [vmem:[%s2] sm:$0x1]
    %v77 = vlaneseq
    %v78 = vshrl.u32 %v77, 7
    %v79 = vsub.s32 0, %v78
    %v80 = vrot.slane %v75, %v79
    %82 = vmatprep.subr.mxu0 0.0
    %83 = vmatpush1.msra.mxu0 %v74
    %84 = vmatprep.subr.mxu0 0.0
    %85 = vmatpush1.msra.mxu0 %v73
    %86 = vmatprep.subr.mxu0 0.0
    %87 = vmatpush1.msra.mxu0 %v72
    %88 = vmatprep.subr.mxu0 0.0
    %89 = vmatpush1.msra.mxu0 %v71
    %90 = vmatprep.subr.mxu0 0.0
    %91 = vmatpush1.msra.mxu0 %v70
    %92 = vmatprep.subr.mxu0 0.0
    %93 = vmatpush1.msra.mxu0 %v69
    %94 = vmatprep.subr.mxu0 0.0
    %95 = vmatpush1.msra.mxu0 %v68
    %96 = vmatprep.subr.mxu0 0.0
    %97 = vmatpush1.msra.mxu0 %v67
    %98 = vmatprep.subr.mxu0 0.0
    %99 = vmatpush1.msra.mxu0 %v66
    %100 = vmatprep.subr.mxu0 0.0
    %101 = vmatpush1.msra.mxu0 %v65
    %102 = vmatprep.subr.mxu0 0.0
    %103 = vmatpush1.msra.mxu0 %v64
    %104 = vmatprep.subr.mxu0 0.0
    %105 = vmatpush1.msra.mxu0 %v63
    %106 = vmatprep.subr.mxu0 0.0
    %107 = vmatpush1.msra.mxu0 %v62
    %108 = vmatprep.subr.mxu0 0.0
    %109 = vmatpush1.msra.mxu0 %v61
    %110 = vmatprep.subr.mxu0 0.0
    %111 = vmatpush1.msra.mxu0 %v60
    %112 = vmatprep.subr.mxu0 0.0
    %113 = vmatpush1.msra.mxu0 %v59
    %114 = vmatprep.subr.mxu0 0.0
    %115 = vmatpush2.msra.mxu0 0.0
    %116 = vmatprep.subr.mxu0 0.0
    %117 = vmatpush2.msra.mxu0 0.0
    %118 = vmatprep.subr.mxu0 0.0
    %119 = vmatpush2.msra.mxu0 0.0
    %120 = vmatprep.subr.mxu0 0.0
    %121 = vmatpush2.msra.mxu0 0.0
    %122 = vmatprep.subr.mxu0 0.0
    %123 = vmatpush2.msra.mxu0 0.0
    %124 = vmatprep.subr.mxu0 0.0
    %125 = vmatpush2.msra.mxu0 0.0
    %126 = vmatprep.subr.mxu0 0.0
    %127 = vmatpush2.msra.mxu0 0.0
    %128 = vmatprep.subr.mxu0 0.0
    %129 = vmatpush2.msra.mxu0 0.0
    %130 = vmatprep.subr.mxu0 0.0
    %131 = vmatpush2.msra.mxu0 0.0
    %132 = vmatprep.subr.mxu0 0.0
    %133 = vmatpush2.msra.mxu0 0.0
    %134 = vmatprep.subr.mxu0 0.0
    %135 = vmatpush2.msra.mxu0 0.0
    %136 = vmatprep.subr.mxu0 0.0
    %137 = vmatpush2.msra.mxu0 0.0
    %138 = vmatprep.subr.mxu0 0.0
    %139 = vmatpush2.msra.mxu0 0.0
    %140 = vmatprep.subr.mxu0 0.0
    %141 = vmatpush2.msra.mxu0 0.0
    %142 = vmatprep.subr.mxu0 0.0
    %143 = vmatpush2.msra.mxu0 0.0
    %144 = vmatprep.subr.mxu0 0.0
    %145 = vmatpush2.msra.mxu0 0.0
    %146 = vmatprep.mubr.f32.mxu0 0.0
    %147 = vmatmul.mubr.f32.gmra.mxu0 %v43
    %v148 = vpop.f32.mrf.mxu0
    %v149 = vadd.f32 %v80, %v148
    %v150 = vpop.f32.mrf.mxu0
    %151 = vmatprep.mubr.f32.mxu0 0.0
    %152 = vmatmul.mubr.f32.gmra.mxu0 %v44
    %v153 = vpop.f32.mrf.mxu0
    %v154 = vadd.f32 %v80, %v153
    %v155 = vpop.f32.mrf.mxu0
    %156 = vmatprep.mubr.f32.mxu0 0.0
    %157 = vmatmul.mubr.f32.gmra.mxu0 %v45
    %v158 = vpop.f32.mrf.mxu0
    %v159 = vadd.f32 %v80, %v158
    %v160 = vpop.f32.mrf.mxu0
    %161 = vmatprep.mubr.f32.mxu0 0.0
    %162 = vmatmul.mubr.f32.gmra.mxu0 %v46
    %v163 = vpop.f32.mrf.mxu0
    %v164 = vadd.f32 %v80, %v163
    %v165 = vpop.f32.mrf.mxu0
    %166 = vmatprep.mubr.f32.mxu0 0.0
    %167 = vmatmul.mubr.f32.gmra.mxu0 %v47
    %v168 = vpop.f32.mrf.mxu0
    %v169 = vadd.f32 %v80, %v168
    %v170 = vpop.f32.mrf.mxu0
    %171 = vmatprep.mubr.f32.mxu0 0.0
    %172 = vmatmul.mubr.f32.gmra.mxu0 %v48
    %v173 = vpop.f32.mrf.mxu0
    %v174 = vadd.f32 %v80, %v173
    %v175 = vpop.f32.mrf.mxu0
    %176 = vmatprep.mubr.f32.mxu0 0.0
    %177 = vmatmul.mubr.f32.gmra.mxu0 %v49
    %v178 = vpop.f32.mrf.mxu0
    %v179 = vadd.f32 %v80, %v178
    %v180 = vpop.f32.mrf.mxu0
    %181 = vmatprep.mubr.f32.mxu0 0.0
    %182 = vmatmul.mubr.f32.gmra.mxu0 %v50
    %v183 = vpop.f32.mrf.mxu0
    %v184 = vadd.f32 %v80, %v183
    %v185 = vpop.f32.mrf.mxu0
    %186 = vmatprep.mubr.f32.mxu0 0.0
    %187 = vmatmul.mubr.f32.gmra.mxu0 %v51
    %v188 = vpop.f32.mrf.mxu0
    %v189 = vadd.f32 %v80, %v188
    %v190 = vpop.f32.mrf.mxu0
    %191 = vmatprep.mubr.f32.mxu0 0.0
    %192 = vmatmul.mubr.f32.gmra.mxu0 %v52
    %v193 = vpop.f32.mrf.mxu0
    %v194 = vadd.f32 %v80, %v193
    %v195 = vpop.f32.mrf.mxu0
    %196 = vmatprep.mubr.f32.mxu0 0.0
    %197 = vmatmul.mubr.f32.gmra.mxu0 %v53
    %v198 = vpop.f32.mrf.mxu0
    %v199 = vadd.f32 %v80, %v198
    %v200 = vpop.f32.mrf.mxu0
    %201 = vmatprep.mubr.f32.mxu0 0.0
    %202 = vmatmul.mubr.f32.gmra.mxu0 %v54
    %v203 = vpop.f32.mrf.mxu0
    %v204 = vadd.f32 %v80, %v203
    %v205 = vpop.f32.mrf.mxu0
    %206 = vmatprep.mubr.f32.mxu0 0.0
    %207 = vmatmul.mubr.f32.gmra.mxu0 %v55
    %v208 = vpop.f32.mrf.mxu0
    %v209 = vadd.f32 %v80, %v208
    %v210 = vpop.f32.mrf.mxu0
    %211 = vmatprep.mubr.f32.mxu0 0.0
    %212 = vmatmul.mubr.f32.gmra.mxu0 %v56
    %v213 = vpop.f32.mrf.mxu0
    %v214 = vadd.f32 %v80, %v213
    %v215 = vpop.f32.mrf.mxu0
    %216 = vmatprep.mubr.f32.mxu0 0.0
    %217 = vmatmul.mubr.f32.gmra.mxu0 %v57
    %v218 = vpop.f32.mrf.mxu0
    %v219 = vadd.f32 %v80, %v218
    %v220 = vpop.f32.mrf.mxu0
    %221 = vmatprep.mubr.f32.mxu0 0.0
    %222 = vmatmul.mubr.f32.gmra.mxu0 %v58
    %v223 = vpop.f32.mrf.mxu0
    %v224 = vadd.f32 %v80, %v223
    %v225 = vpop.f32.mrf.mxu0
    %226 = vdwg.mxu0
    %v227 = vmax.f32 %v149, 0.0
    %v228 = vmax.f32 %v154, 0.0
    %v229 = vmax.f32 %v159, 0.0
    %v230 = vmax.f32 %v164, 0.0
    %v231 = vmax.f32 %v169, 0.0
    %v232 = vmax.f32 %v174, 0.0
    %v233 = vmax.f32 %v179, 0.0
    %v234 = vmax.f32 %v184, 0.0
    %v235 = vmax.f32 %v189, 0.0
    %v236 = vmax.f32 %v194, 0.0
    %v237 = vmax.f32 %v199, 0.0
    %v238 = vmax.f32 %v204, 0.0
    %v239 = vmax.f32 %v209, 0.0
    %v240 = vmax.f32 %v214, 0.0
    %v241 = vmax.f32 %v219, 0.0
    %v242 = vmax.f32 %v224, 0.0
    %243 = vst [vmem:[#allocation7] sm:$0xff] %v227
    %244 = vst [vmem:[#allocation7 + $0x8] sm:$0xff] %v228
    %245 = vst [vmem:[#allocation7 + $0x10] sm:$0xff] %v229
    %246 = vst [vmem:[#allocation7 + $0x18] sm:$0xff] %v230
    %247 = vst [vmem:[#allocation7 + $0x20] sm:$0xff] %v231
    %248 = vst [vmem:[#allocation7 + $0x28] sm:$0xff] %v232
    %249 = vst [vmem:[#allocation7 + $0x30] sm:$0xff] %v233
    %250 = vst [vmem:[#allocation7 + $0x38] sm:$0xff] %v234
    %251 = vst [vmem:[#allocation7 + $0x40] sm:$0xff] %v235
    %252 = vst [vmem:[#allocation7 + $0x48] sm:$0xff] %v236
    %253 = vst [vmem:[#allocation7 + $0x50] sm:$0xff] %v237
    %254 = vst [vmem:[#allocation7 + $0x58] sm:$0xff] %v238
    %255 = vst [vmem:[#allocation7 + $0x60] sm:$0xff] %v239
    %256 = vst [vmem:[#allocation7 + $0x68] sm:$0xff] %v240
    %257 = vst [vmem:[#allocation7 + $0x70] sm:$0xff] %v241
    %258 = vst [vmem:[#allocation7 + $0x78] sm:$0xff] %v242
    // Predicated region
    $region22: #{tpu_custom_call.1} parent=1 // pred_check
      _
    $region23: #{tpu_custom_call.1} parent=1 // pred_check_branch
      %260 = sbr.rel (0) target = $region25
    $region24: #{tpu_custom_call.1} parent=1 // pred_region
      %s262 = ssub.s32 2048, 2048
      %263 = vsyncadd [#allocation4], %s262
      %s264 = sshll.u32 [#allocation7], 4
      %s265 = int_to_ptr.vmem [resolvable:$true] %s264
      %270 = dma.vmem_to_hbm [thread:$0]  %s265, 2048, %s3, [#allocation4], 128, 128, 8
    $region25: #{tpu_custom_call.1} parent=1 // pred_fallthru
      _
    // Predicated region
    $region26: #{tpu_custom_call.1} parent=1 // pred_check
      _
    $region27: #{tpu_custom_call.1} parent=1 // pred_check_branch
      %272 = sbr.rel (0) target = $region29
    $region28: #{tpu_custom_call.1} parent=1 // pred_region
      %273 = dma.done [#allocation4], 2048
    $region29: #{tpu_custom_call.1} parent=1 // pred_fallthru
      _
    %274 = vsyncpa [#allocation3], 1
    %275 = vsyncpa [#allocation6], 1
    %276 = vsyncpa [#allocation4], 1

</llo_original>
